<compile_context>
chip_gen: v5e
topology: v5e:2x2
jax: 0.10.0
libtpu: 0.0.40
codegen_flags: <defaults>
</compile_context>

<pallas_src>
import jax
import jax.numpy as jnp
from jax.experimental import pallas as pl
from jax.experimental.pallas import tpu as pltpu


def _round_up(x, m):
    return ((x + m - 1) // m) * m


def _mlp_softmax_kernel(x_ref, w1_ref, b1_ref, w2_ref, b2_ref, o_ref):
    # Hidden layer: (TB, D)bf16 @ (D, Hp)bf16 -> f32 acc; bias + ReLU in f32.
    h = jnp.dot(x_ref[...], w1_ref[...], preferred_element_type=jnp.float32)
    h = jnp.maximum(h + b1_ref[...], 0.0)

    # Output layer: (TB, Hp)f32 @ (Hp, O)f32 -> f32 logits.  w2 is tiny.
    logits = jnp.dot(h, w2_ref[...], preferred_element_type=jnp.float32)
    logits = logits + b2_ref[...]

    # Numerically stable softmax over the last dim (torch.nn.Softmax, dim=1).
    m = jnp.max(logits, axis=-1, keepdims=True)
    e = jnp.exp(logits - m)
    denom = jnp.sum(e, axis=-1, keepdims=True)
    o_ref[...] = (e * pl.reciprocal(denom, approx=True)).astype(o_ref.dtype)


def dummy_model_forward(x, w1, b1, w2, b2, *, block_b=256):
    """x: (B, C, H, W) (or any (B, ...)) float32 -> (B, 2) softmax probs (f32)."""
    B = x.shape[0]
    x_flat = x.reshape(B, -1)          # same element order as torch.nn.Flatten
    D = x_flat.shape[1]
    Hd = w1.shape[1]                   # 200
    O = w2.shape[1]                    # 2

    # --- pad hidden dim to a multiple of 128 (200 -> 256); pads are inert ---
    Hp = _round_up(Hd, 128)
    if Hp != Hd:
        w1 = jnp.pad(w1, ((0, 0), (0, Hp - Hd)))
        b1 = jnp.pad(b1, (0, Hp - Hd))
        w2 = jnp.pad(w2, ((0, Hp - Hd), (0, 0)))

    # --- batch tiling: TB multiple of 16 (bf16 sublane packing), pad B up ---
    TB = min(block_b, _round_up(B, 16))
    TB = _round_up(TB, 16)
    Bp = _round_up(B, TB)
    if Bp != B:
        x_flat = jnp.pad(x_flat, ((0, Bp - B), (0, 0)))

    # --- bf16 on the big matmul operands, f32 everywhere else --------------
    x_bf = x_flat.astype(jnp.bfloat16)
    w1_bf = w1.astype(jnp.bfloat16)
    w2_f32 = w2.astype(jnp.float32)
    b1_2d = b1.reshape(1, Hp).astype(jnp.float32)
    b2_2d = b2.reshape(1, O).astype(jnp.float32)

    grid = (Bp // TB,)

    cost = pl.CostEstimate(
        flops=2 * Bp * D * Hp + 2 * Bp * Hp * O,
        transcendentals=Bp * O,
        bytes_accessed=(x_bf.size * 2 + w1_bf.size * 2 + w2_f32.size * 4
                        + b1_2d.size * 4 + b2_2d.size * 4 + Bp * O * 4),
    )

    out = pl.pallas_call(
        _mlp_softmax_kernel,
        out_shape=jax.ShapeDtypeStruct((Bp, O), jnp.float32),
        grid=grid,
        in_specs=[
            pl.BlockSpec((TB, D), lambda i: (i, 0)),   # x tile per grid step
            pl.BlockSpec((D, Hp), lambda i: (0, 0)),   # weights stay resident
            pl.BlockSpec((1, Hp), lambda i: (0, 0)),
            pl.BlockSpec((Hp, O), lambda i: (0, 0)),
            pl.BlockSpec((1, O), lambda i: (0, 0)),
        ],
        out_specs=pl.BlockSpec((TB, O), lambda i: (i, 0)),
        compiler_params=pltpu.CompilerParams(
            dimension_semantics=("parallel",),
        ),
        cost_estimate=cost,
    )(x_bf, w1_bf, b1_2d, w2_f32, b2_2d)

    return out[:B]


def init_params(key, in_features, hidden=200, out=2):
    """Deterministic init mimicking torch.nn.Linear (uniform ±1/sqrt(fan_in))."""
    k1, k2, k3, k4 = jax.random.split(key, 4)
    lim1 = 1.0 / jnp.sqrt(in_features)
    lim2 = 1.0 / jnp.sqrt(hidden)
    w1 = jax.random.uniform(k1, (in_features, hidden), jnp.float32, -lim1, lim1)
    b1 = jax.random.uniform(k2, (hidden,), jnp.float32, -lim1, lim1)
    w2 = jax.random.uniform(k3, (hidden, out), jnp.float32, -lim2, lim2)
    b2 = jax.random.uniform(k4, (out,), jnp.float32, -lim2, lim2)
    return w1, b1, w2, b2


if __name__ == "__main__":
    # conf.model.input_shape = (C, H, W) = (4, 16, 16); batch = 2
    B, C, H, W = 2, 4, 16, 16
    in_features = C * H * W

    key = jax.random.PRNGKey(0)
    kx, kp = jax.random.split(key)
    x = jax.random.normal(kx, (B, C, H, W), dtype=jnp.float32)
    w1, b1, w2, b2 = init_params(kp, in_features)

    fwd = jax.jit(dummy_model_forward)
    out = fwd(x, w1, b1, w2, b2)
    out = jax.block_until_ready(out)

    # Pure-JAX f32 reference.  Kernel uses bf16 matmul inputs -> loosened atol.
    xf = x.reshape(B, -1)
    ref = jnp.maximum(xf @ w1 + b1, 0.0) @ w2 + b2
    ref = jax.nn.softmax(ref, axis=-1)

    assert out.shape == (B, 2)
    assert bool(jnp.all(jnp.isfinite(out)))
    assert jnp.allclose(out, ref, atol=3e-2), "mismatch vs reference"
    assert jnp.allclose(jnp.sum(out, axis=-1), 1.0, atol=1e-2)

    print("KERNEL_OK")
</pallas_src>

<mosaic_0001>
module attributes {stable_mosaic.version = 11 : i64} {
  func.func @_mlp_softmax_kernel(%arg0: i32, %arg1: memref<16x1024xbf16, #tpu.memory_space<vmem>>, %arg2: memref<1024x256xbf16, #tpu.memory_space<vmem>>, %arg3: memref<1x256xf32, #tpu.memory_space<vmem>>, %arg4: memref<256x2xf32, #tpu.memory_space<vmem>>, %arg5: memref<1x2xf32, #tpu.memory_space<vmem>>, %arg6: memref<16x2xf32, #tpu.memory_space<vmem>>) attributes {dimension_semantics = [#tpu.dimension_semantics<parallel>], iteration_bounds = array<i64: 1>, scalar_prefetch = 0 : i64, scratch_operands = 0 : i64, tpu.core_type = #tpu.core_type<tc>, window_params = [{transform_indices = @transform_0, window_bounds = array<i64: 16, 1024>}, {pipeline_mode = #tpu.pipeline_mode<synchronous>, transform_indices = @transform_1, window_bounds = array<i64: 1024, 256>}, {pipeline_mode = #tpu.pipeline_mode<synchronous>, transform_indices = @transform_2, window_bounds = array<i64: 1, 256>}, {pipeline_mode = #tpu.pipeline_mode<synchronous>, transform_indices = @transform_3, window_bounds = array<i64: 256, 2>}, {pipeline_mode = #tpu.pipeline_mode<synchronous>, transform_indices = @transform_4, window_bounds = array<i64: 1, 2>}, {transform_indices = @transform_5, window_bounds = array<i64: 16, 2>}]} {
    %c0 = arith.constant 0 : index
    %c0_0 = arith.constant 0 : index
    %0 = vector.load %arg1[%c0, %c0_0] : memref<16x1024xbf16, #tpu.memory_space<vmem>>, vector<16x1024xbf16>
    %c0_1 = arith.constant 0 : index
    %c0_2 = arith.constant 0 : index
    %1 = vector.load %arg2[%c0_1, %c0_2] : memref<1024x256xbf16, #tpu.memory_space<vmem>>, vector<1024x256xbf16>
    %cst = arith.constant dense<0.000000e+00> : vector<16x256xf32>
    %2 = tpu.matmul %0, %1, %cst {dimension_numbers = #tpu.dot_dimension_numbers<[1], [0], [0], [1], [0, 0, 1, 1], [], []>} : vector<16x1024xbf16>, vector<1024x256xbf16>, vector<16x256xf32> -> vector<16x256xf32>
    %c0_3 = arith.constant 0 : index
    %c0_4 = arith.constant 0 : index
    %3 = vector.load %arg3[%c0_3, %c0_4] : memref<1x256xf32, #tpu.memory_space<vmem>>, vector<1x256xf32>
    %4 = vector.broadcast %3 : vector<1x256xf32> to vector<16x256xf32>
    %5 = arith.addf %2, %4 : vector<16x256xf32>
    %cst_5 = arith.constant 0.000000e+00 : f32
    %6 = vector.broadcast %cst_5 : f32 to vector<16x256xf32>
    %7 = arith.maximumf %5, %6 : vector<16x256xf32>
    %c0_6 = arith.constant 0 : index
    %c0_7 = arith.constant 0 : index
    %8 = vector.load %arg4[%c0_6, %c0_7] : memref<256x2xf32, #tpu.memory_space<vmem>>, vector<256x2xf32>
    %cst_8 = arith.constant dense<0.000000e+00> : vector<16x2xf32>
    %9 = tpu.matmul %7, %8, %cst_8 {dimension_numbers = #tpu.dot_dimension_numbers<[1], [0], [0], [1], [0, 0, 1, 1], [], []>} : vector<16x256xf32>, vector<256x2xf32>, vector<16x2xf32> -> vector<16x2xf32>
    %c0_9 = arith.constant 0 : index
    %c0_10 = arith.constant 0 : index
    %10 = vector.load %arg5[%c0_9, %c0_10] : memref<1x2xf32, #tpu.memory_space<vmem>>, vector<1x2xf32>
    %11 = vector.broadcast %10 : vector<1x2xf32> to vector<16x2xf32>
    %12 = arith.addf %9, %11 : vector<16x2xf32>
    %cst_11 = arith.constant dense<0xFF800000> : vector<16xf32>
    %13 = vector.multi_reduction <maximumf>, %12, %cst_11 [1] : vector<16x2xf32> to vector<16xf32>
    %14 = vector.shape_cast %13 : vector<16xf32> to vector<16x1xf32>
    %15 = vector.broadcast %14 : vector<16x1xf32> to vector<16x2xf32>
    %16 = arith.subf %12, %15 : vector<16x2xf32>
    %17 = math.exp %16 : vector<16x2xf32>
    %cst_12 = arith.constant dense<0.000000e+00> : vector<16xf32>
    %18 = vector.multi_reduction <add>, %17, %cst_12 [1] : vector<16x2xf32> to vector<16xf32>
    %19 = vector.shape_cast %18 : vector<16xf32> to vector<16x1xf32>
    %20 = tpu.reciprocal %19 {approx = true} : vector<16x1xf32> -> vector<16x1xf32>
    %21 = vector.broadcast %20 : vector<16x1xf32> to vector<16x2xf32>
    %22 = arith.mulf %17, %21 : vector<16x2xf32>
    %c0_13 = arith.constant 0 : index
    %c0_14 = arith.constant 0 : index
    %23 = vector.load %arg6[%c0_13, %c0_14] : memref<16x2xf32, #tpu.memory_space<vmem>>, vector<16x2xf32>
    tpu.vector_store %arg6[%c0_13, %c0_14], %22 {strides = array<i32>} : memref<16x2xf32, #tpu.memory_space<vmem>>, vector<16x2xf32>,
    return
  }
  func.func @transform_0(%arg0: i32) -> (i32, i32) {
    %c0_i32 = arith.constant 0 : i32
    %c0_i32_0 = arith.constant 0 : i32
    return %arg0, %c0_i32 : i32, i32
  }
  func.func @transform_1(%arg0: i32) -> (i32, i32) {
    %c0_i32 = arith.constant 0 : i32
    %c0_i32_0 = arith.constant 0 : i32
    %c0_i32_1 = arith.constant 0 : i32
    return %c0_i32, %c0_i32_0 : i32, i32
  }
  func.func @transform_2(%arg0: i32) -> (i32, i32) {
    %c0_i32 = arith.constant 0 : i32
    %c0_i32_0 = arith.constant 0 : i32
    %c0_i32_1 = arith.constant 0 : i32
    return %c0_i32, %c0_i32_0 : i32, i32
  }
  func.func @transform_3(%arg0: i32) -> (i32, i32) {
    %c0_i32 = arith.constant 0 : i32
    %c0_i32_0 = arith.constant 0 : i32
    %c0_i32_1 = arith.constant 0 : i32
    return %c0_i32, %c0_i32_0 : i32, i32
  }
  func.func @transform_4(%arg0: i32) -> (i32, i32) {
    %c0_i32 = arith.constant 0 : i32
    %c0_i32_0 = arith.constant 0 : i32
    %c0_i32_1 = arith.constant 0 : i32
    return %c0_i32, %c0_i32_0 : i32, i32
  }
  func.func @transform_5(%arg0: i32) -> (i32, i32) {
    %c0_i32 = arith.constant 0 : i32
    %c0_i32_0 = arith.constant 0 : i32
    return %arg0, %c0_i32 : i32, i32
  }
}

</mosaic_0001>

<llo_original>
// kernel: dummy_model_forward.1
$region0: #{dummy_model_forward.1}
  #allocation0 [shape = 'u32[]', space=smem, size = 0x4, offset = 0x4, fixed_abs, tag = 'smem constant byte address 0x4 - core index']
  #allocation1 [shape = 'u32[72,128]{1,0:T(1,128)}', space=vmem, size = 0x9000, scoped, tag = 'internal scratch']
  %s0 = inlined_call_operand.vmem [shape: bf16[16,1024], index: 0, kind: input, shape index: {}]
  %s1 = inlined_call_operand.vmem [shape: bf16[1024,256], index: 1, kind: input, shape index: {}]
  %s2 = inlined_call_operand.vmem [shape: f32[1,256], index: 2, kind: input, shape index: {}]
  %s3 = inlined_call_operand.vmem [shape: f32[256,2], index: 3, kind: input, shape index: {}]
  %s4 = inlined_call_operand.vmem [shape: f32[1,2], index: 4, kind: input, shape index: {}]
  %s5 = inlined_call_operand.vmem [shape: f32[16,2], index: 5, kind: output, shape index: {}]
  %s6 = sld [smem:[#allocation0]]
  $region30: #{dummy_model_forward.1} parent=0
    _
  %s8 = ssub.s32 1, %s6
  %s9 = scalar_select 0, %s8, %s6
  // Predicated region
  $region2: #{dummy_model_forward.1} parent=0 // pred_check
    _
  $region3: #{dummy_model_forward.1} parent=0 // pred_check_branch
    %11 = sbr.rel (0) target = $region5
  $region4: #{dummy_model_forward.1} parent=0 // pred_region
    _
  $region5: #{dummy_model_forward.1} parent=0 // pred_fallthru
    _
  // Predicated region
  $region6: #{dummy_model_forward.1} parent=0 // pred_check
    _
  $region7: #{dummy_model_forward.1} parent=0 // pred_check_branch
    %13 = sbr.rel (0) target = $region9
  $region8: #{dummy_model_forward.1} parent=0 // pred_region
    _
  $region9: #{dummy_model_forward.1} parent=0 // pred_fallthru
    _
  // Predicated region
  $region10: #{dummy_model_forward.1} parent=0 // pred_check
    _
  $region11: #{dummy_model_forward.1} parent=0 // pred_check_branch
    %15 = sbr.rel (0) target = $region13
  $region12: #{dummy_model_forward.1} parent=0 // pred_region
    _
  $region13: #{dummy_model_forward.1} parent=0 // pred_fallthru
    _
  // Predicated region
  $region14: #{dummy_model_forward.1} parent=0 // pred_check
    _
  $region15: #{dummy_model_forward.1} parent=0 // pred_check_branch
    %17 = sbr.rel (0) target = $region17
  $region16: #{dummy_model_forward.1} parent=0 // pred_region
    _
  $region17: #{dummy_model_forward.1} parent=0 // pred_fallthru
    _
  // Predicated region
  $region18: #{dummy_model_forward.1} parent=0 // pred_check
    _
  $region19: #{dummy_model_forward.1} parent=0 // pred_check_branch
    %19 = sbr.rel (0) target = $region21
  $region20: #{dummy_model_forward.1} parent=0 // pred_region
    _
  $region21: #{dummy_model_forward.1} parent=0 // pred_fallthru
    _
  %v20 = vld [vmem:[%s0] sm:$0xff]
  %v21 = vld [vmem:[%s0 + $0x8] sm:$0xff]
  %v22 = vld [vmem:[%s0 + $0x10] sm:$0xff]
  %v23 = vld [vmem:[%s0 + $0x18] sm:$0xff]
  %v24 = vld [vmem:[%s0 + $0x20] sm:$0xff]
  %v25 = vld [vmem:[%s0 + $0x28] sm:$0xff]
  %v26 = vld [vmem:[%s0 + $0x30] sm:$0xff]
  %v27 = vld [vmem:[%s0 + $0x38] sm:$0xff]
  %v28 = vld [vmem:[%s1] sm:$0xff]
  %v29 = vld [vmem:[%s1 + $0x8] sm:$0xff]
  %v30 = vld [vmem:[%s1 + $0x10] sm:$0xff]
  %v31 = vld [vmem:[%s1 + $0x18] sm:$0xff]
  %v32 = vld [vmem:[%s1 + $0x20] sm:$0xff]
  %v33 = vld [vmem:[%s1 + $0x28] sm:$0xff]
  %v34 = vld [vmem:[%s1 + $0x30] sm:$0xff]
  %v35 = vld [vmem:[%s1 + $0x38] sm:$0xff]
  %v36 = vld [vmem:[%s1 + $0x40] sm:$0xff]
  %v37 = vld [vmem:[%s1 + $0x48] sm:$0xff]
  %v38 = vld [vmem:[%s1 + $0x50] sm:$0xff]
  %v39 = vld [vmem:[%s1 + $0x58] sm:$0xff]
  %v40 = vld [vmem:[%s1 + $0x60] sm:$0xff]
  %v41 = vld [vmem:[%s1 + $0x68] sm:$0xff]
  %v42 = vld [vmem:[%s1 + $0x70] sm:$0xff]
  %v43 = vld [vmem:[%s1 + $0x78] sm:$0xff]
  %v44 = vld [vmem:[%s1 + $0x80] sm:$0xff]
  %v45 = vld [vmem:[%s1 + $0x88] sm:$0xff]
  %v46 = vld [vmem:[%s1 + $0x90] sm:$0xff]
  %v47 = vld [vmem:[%s1 + $0x98] sm:$0xff]
  %v48 = vld [vmem:[%s1 + $0xa0] sm:$0xff]
  %v49 = vld [vmem:[%s1 + $0xa8] sm:$0xff]
  %v50 = vld [vmem:[%s1 + $0xb0] sm:$0xff]
  %v51 = vld [vmem:[%s1 + $0xb8] sm:$0xff]
  %v52 = vld [vmem:[%s1 + $0xc0] sm:$0xff]
  %v53 = vld [vmem:[%s1 + $0xc8] sm:$0xff]
  %v54 = vld [vmem:[%s1 + $0xd0] sm:$0xff]
  %v55 = vld [vmem:[%s1 + $0xd8] sm:$0xff]
  %v56 = vld [vmem:[%s1 + $0xe0] sm:$0xff]
  %v57 = vld [vmem:[%s1 + $0xe8] sm:$0xff]
  %v58 = vld [vmem:[%s1 + $0xf0] sm:$0xff]
  %v59 = vld [vmem:[%s1 + $0xf8] sm:$0xff]
  %v60 = vld [vmem:[%s1 + $0x100] sm:$0xff]
  %v61 = vld [vmem:[%s1 + $0x108] sm:$0xff]
  %v62 = vld [vmem:[%s1 + $0x110] sm:$0xff]
  %v63 = vld [vmem:[%s1 + $0x118] sm:$0xff]
  %v64 = vld [vmem:[%s1 + $0x120] sm:$0xff]
  %v65 = vld [vmem:[%s1 + $0x128] sm:$0xff]
  %v66 = vld [vmem:[%s1 + $0x130] sm:$0xff]
  %v67 = vld [vmem:[%s1 + $0x138] sm:$0xff]
  %v68 = vld [vmem:[%s1 + $0x140] sm:$0xff]
  %v69 = vld [vmem:[%s1 + $0x148] sm:$0xff]
  %v70 = vld [vmem:[%s1 + $0x150] sm:$0xff]
  %v71 = vld [vmem:[%s1 + $0x158] sm:$0xff]
  %v72 = vld [vmem:[%s1 + $0x160] sm:$0xff]
  %v73 = vld [vmem:[%s1 + $0x168] sm:$0xff]
  %v74 = vld [vmem:[%s1 + $0x170] sm:$0xff]
  %v75 = vld [vmem:[%s1 + $0x178] sm:$0xff]
  %v76 = vld [vmem:[%s1 + $0x180] sm:$0xff]
  %v77 = vld [vmem:[%s1 + $0x188] sm:$0xff]
  %v78 = vld [vmem:[%s1 + $0x190] sm:$0xff]
  %v79 = vld [vmem:[%s1 + $0x198] sm:$0xff]
  %v80 = vld [vmem:[%s1 + $0x1a0] sm:$0xff]
  %v81 = vld [vmem:[%s1 + $0x1a8] sm:$0xff]
  %v82 = vld [vmem:[%s1 + $0x1b0] sm:$0xff]
  %v83 = vld [vmem:[%s1 + $0x1b8] sm:$0xff]
  %v84 = vld [vmem:[%s1 + $0x1c0] sm:$0xff]
  %v85 = vld [vmem:[%s1 + $0x1c8] sm:$0xff]
  %v86 = vld [vmem:[%s1 + $0x1d0] sm:$0xff]
  %v87 = vld [vmem:[%s1 + $0x1d8] sm:$0xff]
  %v88 = vld [vmem:[%s1 + $0x1e0] sm:$0xff]
  %v89 = vld [vmem:[%s1 + $0x1e8] sm:$0xff]
  %v90 = vld [vmem:[%s1 + $0x1f0] sm:$0xff]
  %v91 = vld [vmem:[%s1 + $0x1f8] sm:$0xff]
  %v92 = vld [vmem:[%s1 + $0x200] sm:$0xff]
  %v93 = vld [vmem:[%s1 + $0x208] sm:$0xff]
  %v94 = vld [vmem:[%s1 + $0x210] sm:$0xff]
  %v95 = vld [vmem:[%s1 + $0x218] sm:$0xff]
  %v96 = vld [vmem:[%s1 + $0x220] sm:$0xff]
  %v97 = vld [vmem:[%s1 + $0x228] sm:$0xff]
  %v98 = vld [vmem:[%s1 + $0x230] sm:$0xff]
  %v99 = vld [vmem:[%s1 + $0x238] sm:$0xff]
  %v100 = vld [vmem:[%s1 + $0x240] sm:$0xff]
  %v101 = vld [vmem:[%s1 + $0x248] sm:$0xff]
  %v102 = vld [vmem:[%s1 + $0x250] sm:$0xff]
  %v103 = vld [vmem:[%s1 + $0x258] sm:$0xff]
  %v104 = vld [vmem:[%s1 + $0x260] sm:$0xff]
  %v105 = vld [vmem:[%s1 + $0x268] sm:$0xff]
  %v106 = vld [vmem:[%s1 + $0x270] sm:$0xff]
  %v107 = vld [vmem:[%s1 + $0x278] sm:$0xff]
  %v108 = vld [vmem:[%s1 + $0x280] sm:$0xff]
  %v109 = vld [vmem:[%s1 + $0x288] sm:$0xff]
  %v110 = vld [vmem:[%s1 + $0x290] sm:$0xff]
  %v111 = vld [vmem:[%s1 + $0x298] sm:$0xff]
  %v112 = vld [vmem:[%s1 + $0x2a0] sm:$0xff]
  %v113 = vld [vmem:[%s1 + $0x2a8] sm:$0xff]
  %v114 = vld [vmem:[%s1 + $0x2b0] sm:$0xff]
  %v115 = vld [vmem:[%s1 + $0x2b8] sm:$0xff]
  %v116 = vld [vmem:[%s1 + $0x2c0] sm:$0xff]
  %v117 = vld [vmem:[%s1 + $0x2c8] sm:$0xff]
  %v118 = vld [vmem:[%s1 + $0x2d0] sm:$0xff]
  %v119 = vld [vmem:[%s1 + $0x2d8] sm:$0xff]
  %v120 = vld [vmem:[%s1 + $0x2e0] sm:$0xff]
  %v121 = vld [vmem:[%s1 + $0x2e8] sm:$0xff]
  %v122 = vld [vmem:[%s1 + $0x2f0] sm:$0xff]
  %v123 = vld [vmem:[%s1 + $0x2f8] sm:$0xff]
  %v124 = vld [vmem:[%s1 + $0x300] sm:$0xff]
  %v125 = vld [vmem:[%s1 + $0x308] sm:$0xff]
  %v126 = vld [vmem:[%s1 + $0x310] sm:$0xff]
  %v127 = vld [vmem:[%s1 + $0x318] sm:$0xff]
  %v128 = vld [vmem:[%s1 + $0x320] sm:$0xff]
  %v129 = vld [vmem:[%s1 + $0x328] sm:$0xff]
  %v130 = vld [vmem:[%s1 + $0x330] sm:$0xff]
  %v131 = vld [vmem:[%s1 + $0x338] sm:$0xff]
  %v132 = vld [vmem:[%s1 + $0x340] sm:$0xff]
  %v133 = vld [vmem:[%s1 + $0x348] sm:$0xff]
  %v134 = vld [vmem:[%s1 + $0x350] sm:$0xff]
  %v135 = vld [vmem:[%s1 + $0x358] sm:$0xff]
  %v136 = vld [vmem:[%s1 + $0x360] sm:$0xff]
  %v137 = vld [vmem:[%s1 + $0x368] sm:$0xff]
  %v138 = vld [vmem:[%s1 + $0x370] sm:$0xff]
  %v139 = vld [vmem:[%s1 + $0x378] sm:$0xff]
  %v140 = vld [vmem:[%s1 + $0x380] sm:$0xff]
  %v141 = vld [vmem:[%s1 + $0x388] sm:$0xff]
  %v142 = vld [vmem:[%s1 + $0x390] sm:$0xff]
  %v143 = vld [vmem:[%s1 + $0x398] sm:$0xff]
  %v144 = vld [vmem:[%s1 + $0x3a0] sm:$0xff]
  %v145 = vld [vmem:[%s1 + $0x3a8] sm:$0xff]
  %v146 = vld [vmem:[%s1 + $0x3b0] sm:$0xff]
  %v147 = vld [vmem:[%s1 + $0x3b8] sm:$0xff]
  %v148 = vld [vmem:[%s1 + $0x3c0] sm:$0xff]
  %v149 = vld [vmem:[%s1 + $0x3c8] sm:$0xff]
  %v150 = vld [vmem:[%s1 + $0x3d0] sm:$0xff]
  %v151 = vld [vmem:[%s1 + $0x3d8] sm:$0xff]
  %v152 = vld [vmem:[%s1 + $0x3e0] sm:$0xff]
  %v153 = vld [vmem:[%s1 + $0x3e8] sm:$0xff]
  %v154 = vld [vmem:[%s1 + $0x3f0] sm:$0xff]
  %v155 = vld [vmem:[%s1 + $0x3f8] sm:$0xff]
  %v156 = vld [vmem:[%s2] sm:$0x3]
  %v158 = vperm.slane %v156, 0
  %v159 = vperm.slane %v156, 1
  %v170 = vunpack.c.l.b16 %v20
  %v171 = vunpack.c.h.b16 %v20
  %v172 = vunpack.c.l.b16 %v21
  %v173 = vunpack.c.h.b16 %v21
  %v174 = vunpack.c.l.b16 %v22
  %v175 = vunpack.c.h.b16 %v22
  %v176 = vunpack.c.l.b16 %v23
  %v177 = vunpack.c.h.b16 %v23
  %v178 = vunpack.c.l.b16 %v24
  %v179 = vunpack.c.h.b16 %v24
  %v180 = vunpack.c.l.b16 %v25
  %v181 = vunpack.c.h.b16 %v25
  %v182 = vunpack.c.l.b16 %v26
  %v183 = vunpack.c.h.b16 %v26
  %v184 = vunpack.c.l.b16 %v27
  %v185 = vunpack.c.h.b16 %v27
  %v186 = vpack.c.b16 %v178, %v170
  %v187 = vpack.c.b16 %v179, %v171
  %v188 = vpack.c.b16 %v180, %v172
  %v189 = vpack.c.b16 %v181, %v173
  %v190 = vpack.c.b16 %v182, %v174
  %v191 = vpack.c.b16 %v183, %v175
  %v192 = vpack.c.b16 %v184, %v176
  %v193 = vpack.c.b16 %v185, %v177
  %v330 = vunpack.c.l.b16 %v28
  %v331 = vunpack.c.h.b16 %v28
  %v332 = vunpack.c.l.b16 %v29
  %v333 = vunpack.c.h.b16 %v29
  %v334 = vunpack.c.l.b16 %v30
  %v335 = vunpack.c.h.b16 %v30
  %v336 = vunpack.c.l.b16 %v31
  %v337 = vunpack.c.h.b16 %v31
  %v338 = vunpack.c.l.b16 %v32
  %v339 = vunpack.c.h.b16 %v32
  %v340 = vunpack.c.l.b16 %v33
  %v341 = vunpack.c.h.b16 %v33
  %v342 = vunpack.c.l.b16 %v34
  %v343 = vunpack.c.h.b16 %v34
  %v344 = vunpack.c.l.b16 %v35
  %v345 = vunpack.c.h.b16 %v35
  %v346 = vunpack.c.l.b16 %v36
  %v347 = vunpack.c.h.b16 %v36
  %v348 = vunpack.c.l.b16 %v37
  %v349 = vunpack.c.h.b16 %v37
  %v350 = vunpack.c.l.b16 %v38
  %v351 = vunpack.c.h.b16 %v38
  %v352 = vunpack.c.l.b16 %v39
  %v353 = vunpack.c.h.b16 %v39
  %v354 = vunpack.c.l.b16 %v40
  %v355 = vunpack.c.h.b16 %v40
  %v356 = vunpack.c.l.b16 %v41
  %v357 = vunpack.c.h.b16 %v41
  %v358 = vunpack.c.l.b16 %v42
  %v359 = vunpack.c.h.b16 %v42
  %v360 = vunpack.c.l.b16 %v43
  %v361 = vunpack.c.h.b16 %v43
  %v362 = vunpack.c.l.b16 %v44
  %v363 = vunpack.c.h.b16 %v44
  %v364 = vunpack.c.l.b16 %v45
  %v365 = vunpack.c.h.b16 %v45
  %v366 = vunpack.c.l.b16 %v46
  %v367 = vunpack.c.h.b16 %v46
  %v368 = vunpack.c.l.b16 %v47
  %v369 = vunpack.c.h.b16 %v47
  %v370 = vunpack.c.l.b16 %v48
  %v371 = vunpack.c.h.b16 %v48
  %v372 = vunpack.c.l.b16 %v49
  %v373 = vunpack.c.h.b16 %v49
  %v374 = vunpack.c.l.b16 %v50
  %v375 = vunpack.c.h.b16 %v50
  %v376 = vunpack.c.l.b16 %v51
  %v377 = vunpack.c.h.b16 %v51
  %v378 = vunpack.c.l.b16 %v52
  %v379 = vunpack.c.h.b16 %v52
  %v380 = vunpack.c.l.b16 %v53
  %v381 = vunpack.c.h.b16 %v53
  %v382 = vunpack.c.l.b16 %v54
  %v383 = vunpack.c.h.b16 %v54
  %v384 = vunpack.c.l.b16 %v55
  %v385 = vunpack.c.h.b16 %v55
  %v386 = vunpack.c.l.b16 %v56
  %v387 = vunpack.c.h.b16 %v56
  %v388 = vunpack.c.l.b16 %v57
  %v389 = vunpack.c.h.b16 %v57
  %v390 = vunpack.c.l.b16 %v58
  %v391 = vunpack.c.h.b16 %v58
  %v392 = vunpack.c.l.b16 %v59
  %v393 = vunpack.c.h.b16 %v59
  %v394 = vunpack.c.l.b16 %v60
  %v395 = vunpack.c.h.b16 %v60
  %v396 = vunpack.c.l.b16 %v61
  %v397 = vunpack.c.h.b16 %v61
  %v398 = vunpack.c.l.b16 %v62
  %v399 = vunpack.c.h.b16 %v62
  %v400 = vunpack.c.l.b16 %v63
  %v401 = vunpack.c.h.b16 %v63
  %v402 = vunpack.c.l.b16 %v64
  %v403 = vunpack.c.h.b16 %v64
  %v404 = vunpack.c.l.b16 %v65
  %v405 = vunpack.c.h.b16 %v65
  %v406 = vunpack.c.l.b16 %v66
  %v407 = vunpack.c.h.b16 %v66
  %v408 = vunpack.c.l.b16 %v67
  %v409 = vunpack.c.h.b16 %v67
  %v410 = vunpack.c.l.b16 %v68
  %v411 = vunpack.c.h.b16 %v68
  %v412 = vunpack.c.l.b16 %v69
  %v413 = vunpack.c.h.b16 %v69
  %v414 = vunpack.c.l.b16 %v70
  %v415 = vunpack.c.h.b16 %v70
  %v416 = vunpack.c.l.b16 %v71
  %v417 = vunpack.c.h.b16 %v71
  %v418 = vunpack.c.l.b16 %v72
  %v419 = vunpack.c.h.b16 %v72
  %v420 = vunpack.c.l.b16 %v73
  %v421 = vunpack.c.h.b16 %v73
  %v422 = vunpack.c.l.b16 %v74
  %v423 = vunpack.c.h.b16 %v74
  %v424 = vunpack.c.l.b16 %v75
  %v425 = vunpack.c.h.b16 %v75
  %v426 = vunpack.c.l.b16 %v76
  %v427 = vunpack.c.h.b16 %v76
  %v428 = vunpack.c.l.b16 %v77
  %v429 = vunpack.c.h.b16 %v77
  %v430 = vunpack.c.l.b16 %v78
  %v431 = vunpack.c.h.b16 %v78
  %v432 = vunpack.c.l.b16 %v79
  %v433 = vunpack.c.h.b16 %v79
  %v434 = vunpack.c.l.b16 %v80
  %v435 = vunpack.c.h.b16 %v80
  %v436 = vunpack.c.l.b16 %v81
  %v437 = vunpack.c.h.b16 %v81
  %v438 = vunpack.c.l.b16 %v82
  %v439 = vunpack.c.h.b16 %v82
  %v440 = vunpack.c.l.b16 %v83
  %v441 = vunpack.c.h.b16 %v83
  %v442 = vunpack.c.l.b16 %v84
  %v443 = vunpack.c.h.b16 %v84
  %v444 = vunpack.c.l.b16 %v85
  %v445 = vunpack.c.h.b16 %v85
  %v446 = vunpack.c.l.b16 %v86
  %v447 = vunpack.c.h.b16 %v86
  %v448 = vunpack.c.l.b16 %v87
  %v449 = vunpack.c.h.b16 %v87
  %v450 = vunpack.c.l.b16 %v88
  %v451 = vunpack.c.h.b16 %v88
  %v452 = vunpack.c.l.b16 %v89
  %v453 = vunpack.c.h.b16 %v89
  %v454 = vunpack.c.l.b16 %v90
  %v455 = vunpack.c.h.b16 %v90
  %v456 = vunpack.c.l.b16 %v91
  %v457 = vunpack.c.h.b16 %v91
  %v458 = vunpack.c.l.b16 %v92
  %v459 = vunpack.c.h.b16 %v92
  %v460 = vunpack.c.l.b16 %v93
  %v461 = vunpack.c.h.b16 %v93
  %v462 = vunpack.c.l.b16 %v94
  %v463 = vunpack.c.h.b16 %v94
  %v464 = vunpack.c.l.b16 %v95
  %v465 = vunpack.c.h.b16 %v95
  %v466 = vunpack.c.l.b16 %v96
  %v467 = vunpack.c.h.b16 %v96
  %v468 = vunpack.c.l.b16 %v97
  %v469 = vunpack.c.h.b16 %v97
  %v470 = vunpack.c.l.b16 %v98
  %v471 = vunpack.c.h.b16 %v98
  %v472 = vunpack.c.l.b16 %v99
  %v473 = vunpack.c.h.b16 %v99
  %v474 = vunpack.c.l.b16 %v100
  %v475 = vunpack.c.h.b16 %v100
  %v476 = vunpack.c.l.b16 %v101
  %v477 = vunpack.c.h.b16 %v101
  %v478 = vunpack.c.l.b16 %v102
  %v479 = vunpack.c.h.b16 %v102
  %v480 = vunpack.c.l.b16 %v103
  %v481 = vunpack.c.h.b16 %v103
  %v482 = vunpack.c.l.b16 %v104
  %v483 = vunpack.c.h.b16 %v104
  %v484 = vunpack.c.l.b16 %v105
  %v485 = vunpack.c.h.b16 %v105
  %v486 = vunpack.c.l.b16 %v106
  %v487 = vunpack.c.h.b16 %v106
  %v488 = vunpack.c.l.b16 %v107
  %v489 = vunpack.c.h.b16 %v107
  %v490 = vunpack.c.l.b16 %v108
  %v491 = vunpack.c.h.b16 %v108
  %v492 = vunpack.c.l.b16 %v109
  %v493 = vunpack.c.h.b16 %v109
  %v494 = vunpack.c.l.b16 %v110
  %v495 = vunpack.c.h.b16 %v110
  %v496 = vunpack.c.l.b16 %v111
  %v497 = vunpack.c.h.b16 %v111
  %v498 = vunpack.c.l.b16 %v112
  %v499 = vunpack.c.h.b16 %v112
  %v500 = vunpack.c.l.b16 %v113
  %v501 = vunpack.c.h.b16 %v113
  %v502 = vunpack.c.l.b16 %v114
  %v503 = vunpack.c.h.b16 %v114
  %v504 = vunpack.c.l.b16 %v115
  %v505 = vunpack.c.h.b16 %v115
  %v506 = vunpack.c.l.b16 %v116
  %v507 = vunpack.c.h.b16 %v116
  %v508 = vunpack.c.l.b16 %v117
  %v509 = vunpack.c.h.b16 %v117
  %v510 = vunpack.c.l.b16 %v118
  %v511 = vunpack.c.h.b16 %v118
  %v512 = vunpack.c.l.b16 %v119
  %v513 = vunpack.c.h.b16 %v119
  %v514 = vunpack.c.l.b16 %v120
  %v515 = vunpack.c.h.b16 %v120
  %v516 = vunpack.c.l.b16 %v121
  %v517 = vunpack.c.h.b16 %v121
  %v518 = vunpack.c.l.b16 %v122
  %v519 = vunpack.c.h.b16 %v122
  %v520 = vunpack.c.l.b16 %v123
  %v521 = vunpack.c.h.b16 %v123
  %v522 = vunpack.c.l.b16 %v124
  %v523 = vunpack.c.h.b16 %v124
  %v524 = vunpack.c.l.b16 %v125
  %v525 = vunpack.c.h.b16 %v125
  %v526 = vunpack.c.l.b16 %v126
  %v527 = vunpack.c.h.b16 %v126
  %v528 = vunpack.c.l.b16 %v127
  %v529 = vunpack.c.h.b16 %v127
  %v530 = vunpack.c.l.b16 %v128
  %v531 = vunpack.c.h.b16 %v128
  %v532 = vunpack.c.l.b16 %v129
  %v533 = vunpack.c.h.b16 %v129
  %v534 = vunpack.c.l.b16 %v130
  %v535 = vunpack.c.h.b16 %v130
  %v536 = vunpack.c.l.b16 %v131
  %v537 = vunpack.c.h.b16 %v131
  %v538 = vunpack.c.l.b16 %v132
  %v539 = vunpack.c.h.b16 %v132
  %v540 = vunpack.c.l.b16 %v133
  %v541 = vunpack.c.h.b16 %v133
  %v542 = vunpack.c.l.b16 %v134
  %v543 = vunpack.c.h.b16 %v134
  %v544 = vunpack.c.l.b16 %v135
  %v545 = vunpack.c.h.b16 %v135
  %v546 = vunpack.c.l.b16 %v136
  %v547 = vunpack.c.h.b16 %v136
  %v548 = vunpack.c.l.b16 %v137
  %v549 = vunpack.c.h.b16 %v137
  %v550 = vunpack.c.l.b16 %v138
  %v551 = vunpack.c.h.b16 %v138
  %v552 = vunpack.c.l.b16 %v139
  %v553 = vunpack.c.h.b16 %v139
  %v554 = vunpack.c.l.b16 %v140
  %v555 = vunpack.c.h.b16 %v140
  %v556 = vunpack.c.l.b16 %v141
  %v557 = vunpack.c.h.b16 %v141
  %v558 = vunpack.c.l.b16 %v142
  %v559 = vunpack.c.h.b16 %v142
  %v560 = vunpack.c.l.b16 %v143
  %v561 = vunpack.c.h.b16 %v143
  %v562 = vunpack.c.l.b16 %v144
  %v563 = vunpack.c.h.b16 %v144
  %v564 = vunpack.c.l.b16 %v145
  %v565 = vunpack.c.h.b16 %v145
  %v566 = vunpack.c.l.b16 %v146
  %v567 = vunpack.c.h.b16 %v146
  %v568 = vunpack.c.l.b16 %v147
  %v569 = vunpack.c.h.b16 %v147
  %v570 = vunpack.c.l.b16 %v148
  %v571 = vunpack.c.h.b16 %v148
  %v572 = vunpack.c.l.b16 %v149
  %v573 = vunpack.c.h.b16 %v149
  %v574 = vunpack.c.l.b16 %v150
  %v575 = vunpack.c.h.b16 %v150
  %v576 = vunpack.c.l.b16 %v151
  %v577 = vunpack.c.h.b16 %v151
  %v578 = vunpack.c.l.b16 %v152
  %v579 = vunpack.c.h.b16 %v152
  %v580 = vunpack.c.l.b16 %v153
  %v581 = vunpack.c.h.b16 %v153
  %v582 = vunpack.c.l.b16 %v154
  %v583 = vunpack.c.h.b16 %v154
  %v584 = vunpack.c.l.b16 %v155
  %v585 = vunpack.c.h.b16 %v155
  %v586 = vpack.c.b16 %v332, %v330
  %v587 = vpack.c.b16 %v333, %v331
  %v588 = vpack.c.b16 %v336, %v334
  %v589 = vpack.c.b16 %v337, %v335
  %v590 = vpack.c.b16 %v340, %v338
  %v591 = vpack.c.b16 %v341, %v339
  %v592 = vpack.c.b16 %v344, %v342
  %v593 = vpack.c.b16 %v345, %v343
  %v594 = vpack.c.b16 %v348, %v346
  %v595 = vpack.c.b16 %v349, %v347
  %v596 = vpack.c.b16 %v352, %v350
  %v597 = vpack.c.b16 %v353, %v351
  %v598 = vpack.c.b16 %v356, %v354
  %v599 = vpack.c.b16 %v357, %v355
  %v600 = vpack.c.b16 %v360, %v358
  %v601 = vpack.c.b16 %v361, %v359
  %v602 = vpack.c.b16 %v364, %v362
  %v603 = vpack.c.b16 %v365, %v363
  %v604 = vpack.c.b16 %v368, %v366
  %v605 = vpack.c.b16 %v369, %v367
  %v606 = vpack.c.b16 %v372, %v370
  %v607 = vpack.c.b16 %v373, %v371
  %v608 = vpack.c.b16 %v376, %v374
  %v609 = vpack.c.b16 %v377, %v375
  %v610 = vpack.c.b16 %v380, %v378
  %v611 = vpack.c.b16 %v381, %v379
  %v612 = vpack.c.b16 %v384, %v382
  %v613 = vpack.c.b16 %v385, %v383
  %v614 = vpack.c.b16 %v388, %v386
  %v615 = vpack.c.b16 %v389, %v387
  %v616 = vpack.c.b16 %v392, %v390
  %v617 = vpack.c.b16 %v393, %v391
  %v618 = vpack.c.b16 %v396, %v394
  %v619 = vpack.c.b16 %v397, %v395
  %v620 = vpack.c.b16 %v400, %v398
  %v621 = vpack.c.b16 %v401, %v399
  %v622 = vpack.c.b16 %v404, %v402
  %v623 = vpack.c.b16 %v405, %v403
  %v624 = vpack.c.b16 %v408, %v406
  %v625 = vpack.c.b16 %v409, %v407
  %v626 = vpack.c.b16 %v412, %v410
  %v627 = vpack.c.b16 %v413, %v411
  %v628 = vpack.c.b16 %v416, %v414
  %v629 = vpack.c.b16 %v417, %v415
  %v630 = vpack.c.b16 %v420, %v418
  %v631 = vpack.c.b16 %v421, %v419
  %v632 = vpack.c.b16 %v424, %v422
  %v633 = vpack.c.b16 %v425, %v423
  %v634 = vpack.c.b16 %v428, %v426
  %v635 = vpack.c.b16 %v429, %v427
  %v636 = vpack.c.b16 %v432, %v430
  %v637 = vpack.c.b16 %v433, %v431
  %v638 = vpack.c.b16 %v436, %v434
  %v639 = vpack.c.b16 %v437, %v435
  %v640 = vpack.c.b16 %v440, %v438
  %v641 = vpack.c.b16 %v441, %v439
  %v642 = vpack.c.b16 %v444, %v442
  %v643 = vpack.c.b16 %v445, %v443
  %v644 = vpack.c.b16 %v448, %v446
  %v645 = vpack.c.b16 %v449, %v447
  %v646 = vpack.c.b16 %v452, %v450
  %v647 = vpack.c.b16 %v453, %v451
  %v648 = vpack.c.b16 %v456, %v454
  %v649 = vpack.c.b16 %v457, %v455
  %v650 = vpack.c.b16 %v460, %v458
  %v651 = vpack.c.b16 %v461, %v459
  %v652 = vpack.c.b16 %v464, %v462
  %v653 = vpack.c.b16 %v465, %v463
  %v654 = vpack.c.b16 %v468, %v466
  %v655 = vpack.c.b16 %v469, %v467
  %v656 = vpack.c.b16 %v472, %v470
  %v657 = vpack.c.b16 %v473, %v471
  %v658 = vpack.c.b16 %v476, %v474
  %v659 = vpack.c.b16 %v477, %v475
  %v660 = vpack.c.b16 %v480, %v478
  %v661 = vpack.c.b16 %v481, %v479
  %v662 = vpack.c.b16 %v484, %v482
  %v663 = vpack.c.b16 %v485, %v483
  %v664 = vpack.c.b16 %v488, %v486
  %v665 = vpack.c.b16 %v489, %v487
  %v666 = vpack.c.b16 %v492, %v490
  %v667 = vpack.c.b16 %v493, %v491
  %v668 = vpack.c.b16 %v496, %v494
  %v669 = vpack.c.b16 %v497, %v495
  %v670 = vpack.c.b16 %v500, %v498
  %v671 = vpack.c.b16 %v501, %v499
  %v672 = vpack.c.b16 %v504, %v502
  %v673 = vpack.c.b16 %v505, %v503
  %v674 = vpack.c.b16 %v508, %v506
  %v675 = vpack.c.b16 %v509, %v507
  %v676 = vpack.c.b16 %v512, %v510
  %v677 = vpack.c.b16 %v513, %v511
  %v678 = vpack.c.b16 %v516, %v514
  %v679 = vpack.c.b16 %v517, %v515
  %v680 = vpack.c.b16 %v520, %v518
  %v681 = vpack.c.b16 %v521, %v519
  %v682 = vpack.c.b16 %v524, %v522
  %v683 = vpack.c.b16 %v525, %v523
  %v684 = vpack.c.b16 %v528, %v526
  %v685 = vpack.c.b16 %v529, %v527
  %v686 = vpack.c.b16 %v532, %v530
  %v687 = vpack.c.b16 %v533, %v531
  %v688 = vpack.c.b16 %v536, %v534
  %v689 = vpack.c.b16 %v537, %v535
  %v690 = vpack.c.b16 %v540, %v538
  %v691 = vpack.c.b16 %v541, %v539
  %v692 = vpack.c.b16 %v544, %v542
  %v693 = vpack.c.b16 %v545, %v543
  %v694 = vpack.c.b16 %v548, %v546
  %v695 = vpack.c.b16 %v549, %v547
  %v696 = vpack.c.b16 %v552, %v550
  %v697 = vpack.c.b16 %v553, %v551
  %v698 = vpack.c.b16 %v556, %v554
  %v699 = vpack.c.b16 %v557, %v555
  %v700 = vpack.c.b16 %v560, %v558
  %v701 = vpack.c.b16 %v561, %v559
  %v702 = vpack.c.b16 %v564, %v562
  %v703 = vpack.c.b16 %v565, %v563
  %v704 = vpack.c.b16 %v568, %v566
  %v705 = vpack.c.b16 %v569, %v567
  %v706 = vpack.c.b16 %v572, %v570
  %v707 = vpack.c.b16 %v573, %v571
  %v708 = vpack.c.b16 %v576, %v574
  %v709 = vpack.c.b16 %v577, %v575
  %v710 = vpack.c.b16 %v580, %v578
  %v711 = vpack.c.b16 %v581, %v579
  %v712 = vpack.c.b16 %v584, %v582
  %v713 = vpack.c.b16 %v585, %v583
  %842 = vmatpush.bf16.msra.mxu0 %v600
  %843 = vmatpush.bf16.msra.mxu0 %v598
  %844 = vmatpush.bf16.msra.mxu0 %v596
  %845 = vmatpush.bf16.msra.mxu0 %v594
  %846 = vmatpush.bf16.msra.mxu0 %v592
  %847 = vmatpush.bf16.msra.mxu0 %v590
  %848 = vmatpush.bf16.msra.mxu0 %v588
  %849 = vmatpush.bf16.msra.mxu0 %v586
  %850 = vmatmul.bf16.gmra.mxu0 %v186
  %v851 = vpop.f32.mrf.mxu0
  %v852 = vadd.f32 %v158, %v851
  %v853 = vpop.f32.mrf.mxu0
  %v854 = vadd.f32 %v158, %v853
  %855 = vdwg.mxu0
  %856 = vmatpush.bf16.msra.mxu0 %v616
  %857 = vmatpush.bf16.msra.mxu0 %v614
  %858 = vmatpush.bf16.msra.mxu0 %v612
  %859 = vmatpush.bf16.msra.mxu0 %v610
  %860 = vmatpush.bf16.msra.mxu0 %v608
  %861 = vmatpush.bf16.msra.mxu0 %v606
  %862 = vmatpush.bf16.msra.mxu0 %v604
  %863 = vmatpush.bf16.msra.mxu0 %v602
  %864 = vmatmul.bf16.gmra.mxu0 %v187
  %v865 = vpop.f32.mrf.mxu0
  %v866 = vadd.f32 %v852, %v865
  %v867 = vpop.f32.mrf.mxu0
  %v868 = vadd.f32 %v854, %v867
  %869 = vdwg.mxu0
  %870 = vmatpush.bf16.msra.mxu0 %v632
  %871 = vmatpush.bf16.msra.mxu0 %v630
  %872 = vmatpush.bf16.msra.mxu0 %v628
  %873 = vmatpush.bf16.msra.mxu0 %v626
  %874 = vmatpush.bf16.msra.mxu0 %v624
  %875 = vmatpush.bf16.msra.mxu0 %v622
  %876 = vmatpush.bf16.msra.mxu0 %v620
  %877 = vmatpush.bf16.msra.mxu0 %v618
  %878 = vmatmul.bf16.gmra.mxu0 %v188
  %v879 = vpop.f32.mrf.mxu0
  %v880 = vadd.f32 %v866, %v879
  %v881 = vpop.f32.mrf.mxu0
  %v882 = vadd.f32 %v868, %v881
  %883 = vdwg.mxu0
  %884 = vmatpush.bf16.msra.mxu0 %v648
  %885 = vmatpush.bf16.msra.mxu0 %v646
  %886 = vmatpush.bf16.msra.mxu0 %v644
  %887 = vmatpush.bf16.msra.mxu0 %v642
  %888 = vmatpush.bf16.msra.mxu0 %v640
  %889 = vmatpush.bf16.msra.mxu0 %v638
  %890 = vmatpush.bf16.msra.mxu0 %v636
  %891 = vmatpush.bf16.msra.mxu0 %v634
  %892 = vmatmul.bf16.gmra.mxu0 %v189
  %v893 = vpop.f32.mrf.mxu0
  %v894 = vadd.f32 %v880, %v893
  %v895 = vpop.f32.mrf.mxu0
  %v896 = vadd.f32 %v882, %v895
  %897 = vdwg.mxu0
  %898 = vmatpush.bf16.msra.mxu0 %v664
  %899 = vmatpush.bf16.msra.mxu0 %v662
  %900 = vmatpush.bf16.msra.mxu0 %v660
  %901 = vmatpush.bf16.msra.mxu0 %v658
  %902 = vmatpush.bf16.msra.mxu0 %v656
  %903 = vmatpush.bf16.msra.mxu0 %v654
  %904 = vmatpush.bf16.msra.mxu0 %v652
  %905 = vmatpush.bf16.msra.mxu0 %v650
  %906 = vmatmul.bf16.gmra.mxu0 %v190
  %v907 = vpop.f32.mrf.mxu0
  %v908 = vadd.f32 %v894, %v907
  %v909 = vpop.f32.mrf.mxu0
  %v910 = vadd.f32 %v896, %v909
  %911 = vdwg.mxu0
  %912 = vmatpush.bf16.msra.mxu0 %v680
  %913 = vmatpush.bf16.msra.mxu0 %v678
  %914 = vmatpush.bf16.msra.mxu0 %v676
  %915 = vmatpush.bf16.msra.mxu0 %v674
  %916 = vmatpush.bf16.msra.mxu0 %v672
  %917 = vmatpush.bf16.msra.mxu0 %v670
  %918 = vmatpush.bf16.msra.mxu0 %v668
  %919 = vmatpush.bf16.msra.mxu0 %v666
  %920 = vmatmul.bf16.gmra.mxu0 %v191
  %v921 = vpop.f32.mrf.mxu0
  %v922 = vadd.f32 %v908, %v921
  %v923 = vpop.f32.mrf.mxu0
  %v924 = vadd.f32 %v910, %v923
  %925 = vdwg.mxu0
  %926 = vmatpush.bf16.msra.mxu0 %v696
  %927 = vmatpush.bf16.msra.mxu0 %v694
  %928 = vmatpush.bf16.msra.mxu0 %v692
  %929 = vmatpush.bf16.msra.mxu0 %v690
  %930 = vmatpush.bf16.msra.mxu0 %v688
  %931 = vmatpush.bf16.msra.mxu0 %v686
  %932 = vmatpush.bf16.msra.mxu0 %v684
  %933 = vmatpush.bf16.msra.mxu0 %v682
  %934 = vmatmul.bf16.gmra.mxu0 %v192
  %v935 = vpop.f32.mrf.mxu0
  %v936 = vadd.f32 %v922, %v935
  %v937 = vpop.f32.mrf.mxu0
  %v938 = vadd.f32 %v924, %v937
  %939 = vdwg.mxu0
  %940 = vmatpush.bf16.msra.mxu0 %v712
  %941 = vmatpush.bf16.msra.mxu0 %v710
  %942 = vmatpush.bf16.msra.mxu0 %v708
  %943 = vmatpush.bf16.msra.mxu0 %v706
  %944 = vmatpush.bf16.msra.mxu0 %v704
  %945 = vmatpush.bf16.msra.mxu0 %v702
  %946 = vmatpush.bf16.msra.mxu0 %v700
  %947 = vmatpush.bf16.msra.mxu0 %v698
  %948 = vmatmul.bf16.gmra.mxu0 %v193
  %v949 = vpop.f32.mrf.mxu0
  %v950 = vadd.f32 %v936, %v949
  %v951 = vpop.f32.mrf.mxu0
  %v952 = vadd.f32 %v938, %v951
  %953 = vdwg.mxu0
  %954 = vmatpush.bf16.msra.mxu0 %v601
  %955 = vmatpush.bf16.msra.mxu0 %v599
  %956 = vmatpush.bf16.msra.mxu0 %v597
  %957 = vmatpush.bf16.msra.mxu0 %v595
  %958 = vmatpush.bf16.msra.mxu0 %v593
  %959 = vmatpush.bf16.msra.mxu0 %v591
  %960 = vmatpush.bf16.msra.mxu0 %v589
  %961 = vmatpush.bf16.msra.mxu0 %v587
  %962 = vmatmul.bf16.gmra.mxu0 %v186
  %v963 = vpop.f32.mrf.mxu0
  %v964 = vadd.f32 %v159, %v963
  %v965 = vpop.f32.mrf.mxu0
  %v966 = vadd.f32 %v159, %v965
  %967 = vdwg.mxu0
  %968 = vmatpush.bf16.msra.mxu0 %v617
  %969 = vmatpush.bf16.msra.mxu0 %v615
  %970 = vmatpush.bf16.msra.mxu0 %v613
  %971 = vmatpush.bf16.msra.mxu0 %v611
  %972 = vmatpush.bf16.msra.mxu0 %v609
  %973 = vmatpush.bf16.msra.mxu0 %v607
  %974 = vmatpush.bf16.msra.mxu0 %v605
  %975 = vmatpush.bf16.msra.mxu0 %v603
  %976 = vmatmul.bf16.gmra.mxu0 %v187
  %v977 = vpop.f32.mrf.mxu0
  %v978 = vadd.f32 %v964, %v977
  %v979 = vpop.f32.mrf.mxu0
  %v980 = vadd.f32 %v966, %v979
  %981 = vdwg.mxu0
  %982 = vmatpush.bf16.msra.mxu0 %v633
  %983 = vmatpush.bf16.msra.mxu0 %v631
  %984 = vmatpush.bf16.msra.mxu0 %v629
  %985 = vmatpush.bf16.msra.mxu0 %v627
  %986 = vmatpush.bf16.msra.mxu0 %v625
  %987 = vmatpush.bf16.msra.mxu0 %v623
  %988 = vmatpush.bf16.msra.mxu0 %v621
  %989 = vmatpush.bf16.msra.mxu0 %v619
  %990 = vmatmul.bf16.gmra.mxu0 %v188
  %v991 = vpop.f32.mrf.mxu0
  %v992 = vadd.f32 %v978, %v991
  %v993 = vpop.f32.mrf.mxu0
  %v994 = vadd.f32 %v980, %v993
  %995 = vdwg.mxu0
  %996 = vmatpush.bf16.msra.mxu0 %v649
  %997 = vmatpush.bf16.msra.mxu0 %v647
  %998 = vmatpush.bf16.msra.mxu0 %v645
  %999 = vmatpush.bf16.msra.mxu0 %v643
  %1000 = vmatpush.bf16.msra.mxu0 %v641
  %1001 = vmatpush.bf16.msra.mxu0 %v639
  %1002 = vmatpush.bf16.msra.mxu0 %v637
  %1003 = vmatpush.bf16.msra.mxu0 %v635
  %1004 = vmatmul.bf16.gmra.mxu0 %v189
  %v1005 = vpop.f32.mrf.mxu0
  %v1006 = vadd.f32 %v992, %v1005
  %v1007 = vpop.f32.mrf.mxu0
  %v1008 = vadd.f32 %v994, %v1007
  %1009 = vdwg.mxu0
  %1010 = vmatpush.bf16.msra.mxu0 %v665
  %1011 = vmatpush.bf16.msra.mxu0 %v663
  %1012 = vmatpush.bf16.msra.mxu0 %v661
  %1013 = vmatpush.bf16.msra.mxu0 %v659
  %1014 = vmatpush.bf16.msra.mxu0 %v657
  %1015 = vmatpush.bf16.msra.mxu0 %v655
  %1016 = vmatpush.bf16.msra.mxu0 %v653
  %1017 = vmatpush.bf16.msra.mxu0 %v651
  %1018 = vmatmul.bf16.gmra.mxu0 %v190
  %v1019 = vpop.f32.mrf.mxu0
  %v1020 = vadd.f32 %v1006, %v1019
  %v1021 = vpop.f32.mrf.mxu0
  %v1022 = vadd.f32 %v1008, %v1021
  %1023 = vdwg.mxu0
  %1024 = vmatpush.bf16.msra.mxu0 %v681
  %1025 = vmatpush.bf16.msra.mxu0 %v679
  %1026 = vmatpush.bf16.msra.mxu0 %v677
  %1027 = vmatpush.bf16.msra.mxu0 %v675
  %1028 = vmatpush.bf16.msra.mxu0 %v673
  %1029 = vmatpush.bf16.msra.mxu0 %v671
  %1030 = vmatpush.bf16.msra.mxu0 %v669
  %1031 = vmatpush.bf16.msra.mxu0 %v667
  %1032 = vmatmul.bf16.gmra.mxu0 %v191
  %v1033 = vpop.f32.mrf.mxu0
  %v1034 = vadd.f32 %v1020, %v1033
  %v1035 = vpop.f32.mrf.mxu0
  %v1036 = vadd.f32 %v1022, %v1035
  %1037 = vdwg.mxu0
  %1038 = vmatpush.bf16.msra.mxu0 %v697
  %1039 = vmatpush.bf16.msra.mxu0 %v695
  %1040 = vmatpush.bf16.msra.mxu0 %v693
  %1041 = vmatpush.bf16.msra.mxu0 %v691
  %1042 = vmatpush.bf16.msra.mxu0 %v689
  %1043 = vmatpush.bf16.msra.mxu0 %v687
  %1044 = vmatpush.bf16.msra.mxu0 %v685
  %1045 = vmatpush.bf16.msra.mxu0 %v683
  %1046 = vmatmul.bf16.gmra.mxu0 %v192
  %v1047 = vpop.f32.mrf.mxu0
  %v1048 = vadd.f32 %v1034, %v1047
  %v1049 = vpop.f32.mrf.mxu0
  %v1050 = vadd.f32 %v1036, %v1049
  %1051 = vdwg.mxu0
  %1052 = vmatpush.bf16.msra.mxu0 %v713
  %1053 = vmatpush.bf16.msra.mxu0 %v711
  %1054 = vmatpush.bf16.msra.mxu0 %v709
  %1055 = vmatpush.bf16.msra.mxu0 %v707
  %1056 = vmatpush.bf16.msra.mxu0 %v705
  %1057 = vmatpush.bf16.msra.mxu0 %v703
  %1058 = vmatpush.bf16.msra.mxu0 %v701
  %1059 = vmatpush.bf16.msra.mxu0 %v699
  %1060 = vmatmul.bf16.gmra.mxu0 %v193
  %v1061 = vpop.f32.mrf.mxu0
  %v1062 = vadd.f32 %v1048, %v1061
  %v1063 = vpop.f32.mrf.mxu0
  %v1064 = vadd.f32 %v1050, %v1063
  %1065 = vdwg.mxu0
  %v1066 = vmax.f32 %v950, 0.0
  %v1067 = vmax.f32 %v1062, 0.0
  %v1068 = vmax.f32 %v952, 0.0
  %v1069 = vmax.f32 %v1064, 0.0
  %v1070 = vld [vmem:[%s3] sm:$0xff]
  %v1071 = vld [vmem:[%s3 + $0x8] sm:$0xff]
  %v1072 = vld [vmem:[%s3 + $0x10] sm:$0xff]
  %v1073 = vld [vmem:[%s3 + $0x18] sm:$0xff]
  %v1074 = vld [vmem:[%s3 + $0x20] sm:$0xff]
  %v1075 = vld [vmem:[%s3 + $0x28] sm:$0xff]
  %v1076 = vld [vmem:[%s3 + $0x30] sm:$0xff]
  %v1077 = vld [vmem:[%s3 + $0x38] sm:$0xff]
  %v1078 = vld [vmem:[%s3 + $0x40] sm:$0xff]
  %v1079 = vld [vmem:[%s3 + $0x48] sm:$0xff]
  %v1080 = vld [vmem:[%s3 + $0x50] sm:$0xff]
  %v1081 = vld [vmem:[%s3 + $0x58] sm:$0xff]
  %v1082 = vld [vmem:[%s3 + $0x60] sm:$0xff]
  %v1083 = vld [vmem:[%s3 + $0x68] sm:$0xff]
  %v1084 = vld [vmem:[%s3 + $0x70] sm:$0xff]
  %v1085 = vld [vmem:[%s3 + $0x78] sm:$0xff]
  %v1086 = vld [vmem:[%s3 + $0x80] sm:$0xff]
  %v1087 = vld [vmem:[%s3 + $0x88] sm:$0xff]
  %v1088 = vld [vmem:[%s3 + $0x90] sm:$0xff]
  %v1089 = vld [vmem:[%s3 + $0x98] sm:$0xff]
  %v1090 = vld [vmem:[%s3 + $0xa0] sm:$0xff]
  %v1091 = vld [vmem:[%s3 + $0xa8] sm:$0xff]
  %v1092 = vld [vmem:[%s3 + $0xb0] sm:$0xff]
  %v1093 = vld [vmem:[%s3 + $0xb8] sm:$0xff]
  %v1094 = vld [vmem:[%s3 + $0xc0] sm:$0xff]
  %v1095 = vld [vmem:[%s3 + $0xc8] sm:$0xff]
  %v1096 = vld [vmem:[%s3 + $0xd0] sm:$0xff]
  %v1097 = vld [vmem:[%s3 + $0xd8] sm:$0xff]
  %v1098 = vld [vmem:[%s3 + $0xe0] sm:$0xff]
  %v1099 = vld [vmem:[%s3 + $0xe8] sm:$0xff]
  %v1100 = vld [vmem:[%s3 + $0xf0] sm:$0xff]
  %v1101 = vld [vmem:[%s3 + $0xf8] sm:$0xff]
  %v1102 = vld [vmem:[%s4] sm:$0x1]
  %v1104 = vperm.slane %v1102, 0
  %1106 = vmatpush.msra.mxu0 %v1085
  %1107 = vmatpush.msra.mxu0 %v1084
  %1108 = vmatpush.msra.mxu0 %v1083
  %1109 = vmatpush.msra.mxu0 %v1082
  %1110 = vmatpush.msra.mxu0 %v1081
  %1111 = vmatpush.msra.mxu0 %v1080
  %1112 = vmatpush.msra.mxu0 %v1079
  %1113 = vmatpush.msra.mxu0 %v1078
  %1114 = vmatpush.msra.mxu0 %v1077
  %1115 = vmatpush.msra.mxu0 %v1076
  %1116 = vmatpush.msra.mxu0 %v1075
  %1117 = vmatpush.msra.mxu0 %v1074
  %1118 = vmatpush.msra.mxu0 %v1073
  %1119 = vmatpush.msra.mxu0 %v1072
  %1120 = vmatpush.msra.mxu0 %v1071
  %1121 = vmatpush.msra.mxu0 %v1070
  %1122 = vmatmul.f32.gmra.mxu0 %v1066
  %v1123 = vpop.f32.mrf.mxu0
  %v1124 = vadd.f32 %v1104, %v1123
  %1125 = vmatmul.f32.gmra.mxu0 %v1068
  %v1126 = vpop.f32.mrf.mxu0
  %v1127 = vadd.f32 %v1104, %v1126
  %1128 = vdwg.mxu0
  %1129 = vmatpush.msra.mxu0 %v1101
  %1130 = vmatpush.msra.mxu0 %v1100
  %1131 = vmatpush.msra.mxu0 %v1099
  %1132 = vmatpush.msra.mxu0 %v1098
  %1133 = vmatpush.msra.mxu0 %v1097
  %1134 = vmatpush.msra.mxu0 %v1096
  %1135 = vmatpush.msra.mxu0 %v1095
  %1136 = vmatpush.msra.mxu0 %v1094
  %1137 = vmatpush.msra.mxu0 %v1093
  %1138 = vmatpush.msra.mxu0 %v1092
  %1139 = vmatpush.msra.mxu0 %v1091
  %1140 = vmatpush.msra.mxu0 %v1090
  %1141 = vmatpush.msra.mxu0 %v1089
  %1142 = vmatpush.msra.mxu0 %v1088
  %1143 = vmatpush.msra.mxu0 %v1087
  %1144 = vmatpush.msra.mxu0 %v1086
  %1145 = vmatmul.f32.gmra.mxu0 %v1067
  %v1146 = vpop.f32.mrf.mxu0
  %v1147 = vadd.f32 %v1124, %v1146
  %1148 = vmatmul.f32.gmra.mxu0 %v1069
  %v1149 = vpop.f32.mrf.mxu0
  %v1150 = vadd.f32 %v1127, %v1149
  %1151 = vdwg.mxu0
  %vm1152 = vcmask 15360
  %v1153 = vsel %vm1152, %v1147, -inf
  %1154 = vmax.xlane.f32.xlu0 %v1153
  %v1155 = vpop.xlane.xlu0 %1154
  %v1156 = vsel %vm1152, %v1150, -inf
  %1157 = vmax.xlane.f32.xlu0 %v1156
  %v1158 = vpop.xlane.xlu0 %1157
  %v1159 = vsub.f32 %v1147, %v1155
  %v1160 = vsub.f32 %v1150, %v1158
  %v1161 = vmul.f32 %v1159, 1.442695
  %v1162 = vpow.pop %v1161
  %v1163 = vmul.f32 %v1160, 1.442695
  %v1164 = vpow.pop %v1163
  %v1165 = vsel %vm1152, %v1162, 0.0
  %1166 = vadd.xlane.f32.xlu0 %v1165
  %v1167 = vpop.xlane.xlu0 %1166
  %v1168 = vsel %vm1152, %v1164, 0.0
  %1169 = vadd.xlane.f32.xlu0 %v1168
  %v1170 = vpop.xlane.xlu0 %1169
  %v1171 = vrcp.pop %v1167
  %v1172 = vrcp.pop %v1170
  %v1173 = vmul.f32 %v1162, %v1171
  %v1174 = vmul.f32 %v1164, %v1172
  %1175 = vst.msk [vmem:[%s5] sm:$0xff] %vm1152, %v1173
  %1176 = vst.msk [vmem:[%s5 + $0x8] sm:$0xff] %vm1152, %v1174
  // Predicated region
  $region22: #{dummy_model_forward.1} parent=0 // pred_check
    _
  $region23: #{dummy_model_forward.1} parent=0 // pred_check_branch
    %1178 = sbr.rel (0) target = $region25
  $region24: #{dummy_model_forward.1} parent=0 // pred_region
    _
  $region25: #{dummy_model_forward.1} parent=0 // pred_fallthru
    _
  // Predicated region
  $region26: #{dummy_model_forward.1} parent=0 // pred_check
    _
  $region27: #{dummy_model_forward.1} parent=0 // pred_check_branch
    %1180 = sbr.rel (0) target = $region29
  $region28: #{dummy_model_forward.1} parent=0 // pred_region
    _
  $region29: #{dummy_model_forward.1} parent=0 // pred_fallthru
    _

</llo_original>
